<compile_context>
chip_gen: v7x
topology: tpu7x:2x2x1
jax: 0.10.0
libtpu: 0.0.40
codegen_flags: <defaults>
</compile_context>

<pallas_src>
import functools

import jax
import jax.numpy as jnp
from jax import lax
from jax.experimental import pallas as pl
from jax.experimental.pallas import tpu as pltpu


def _round_up(x, m):
    return (x + m - 1) // m * m


def _matmul_bn_act_kernel(w_ref, p_ref, scale_ref, shift_ref, o_ref, *, slope):
    """One (c_out_pad, tile_m) output tile.

    Accumulates bf16 W @ P directly into the resident f32 output block across
    the trailing K grid axis, then applies fused BatchNorm (per-channel
    scale/shift) + activation in place on the last K step.
    """
    k = pl.program_id(1)

    prod = jnp.dot(w_ref[...], p_ref[...], preferred_element_type=jnp.float32)

    @pl.when(k == 0)
    def _init():
        o_ref[...] = prod

    @pl.when(k > 0)
    def _accumulate():
        o_ref[...] += prod

    @pl.when(k == pl.num_programs(1) - 1)
    def _finalize():
        y = o_ref[...] * scale_ref[...] + shift_ref[...]
        # slope = 0.2 -> LeakyReLU(0.2);  slope = 0.0 -> ReLU
        o_ref[...] = jnp.maximum(y, slope * y)


def _conv_bn_act_matmul(w_mat, patches, scale, shift, *, slope):
    """Fused (c_out, K) @ (K, M) matmul + per-channel scale/shift + activation.

    Operands are cast/padded to bf16 with c_out padded to a multiple of 8 and
    M padded to a lane-dense multiple of the tile; accumulation is f32.
    Returns an f32 (c_out, M) array.
    """
    c_out, k_dim = w_mat.shape
    m_dim = patches.shape[1]

    # Output-channel padding -> full sublanes, unmasked stores.
    c_pad = _round_up(c_out, 8)

    # Reduction tiling: always cap tile_k so double-buffered blocks fit v7x's
    # 64 MiB VMEM; single K step (resident W/scale/shift) whenever K is small.
    max_tk = 512
    if k_dim <= max_tk:
        k_pad = _round_up(k_dim, 8)
        tile_k = k_pad
    else:
        k_pad = _round_up(k_dim, max_tk)
        tile_k = max_tk

    # Lane-dense pixel tiles (multiples of 128).  Larger tiles amortize the
    # per-grid-step overhead (v5e/v6e have 128 MiB VMEM); the footprint loop
    # keeps the per-step working set within a v7x-safe budget.
    if m_dim >= 4096:
        tile_m = 1024
    elif m_dim >= 1024:
        tile_m = 512
    elif m_dim >= 512:
        tile_m = 256
    else:
        tile_m = 128

    def _footprint(tm):
        return (2 * (c_pad * tile_k + tile_k * tm) * 2   # bf16 W + patches (double-buffered)
                + 2 * c_pad * tm * 4                      # f32 output block (double-buffered)
                + 4 * c_pad * 4)                          # scale + shift

    while tile_m > 128 and _footprint(tile_m) > 36 * 1024 * 1024:
        tile_m //= 2

    m_pad = _round_up(m_dim, tile_m)

    w_mat = jnp.pad(w_mat, ((0, c_pad - c_out), (0, k_pad - k_dim))).astype(jnp.bfloat16)
    patches = jnp.pad(patches.astype(jnp.bfloat16),
                      ((0, k_pad - k_dim), (0, m_pad - m_dim)))
    scale = jnp.pad(scale, ((0, c_pad - c_out), (0, 0)))
    shift = jnp.pad(shift, ((0, c_pad - c_out), (0, 0)))

    grid = (m_pad // tile_m, k_pad // tile_k)

    out = pl.pallas_call(
        functools.partial(_matmul_bn_act_kernel, slope=slope),
        out_shape=jax.ShapeDtypeStruct((c_pad, m_pad), jnp.float32),
        grid=grid,
        in_specs=[
            pl.BlockSpec((c_pad, tile_k), lambda m, k: (0, k)),
            pl.BlockSpec((tile_k, tile_m), lambda m, k: (k, m)),
            pl.BlockSpec((c_pad, 1), lambda m, k: (0, 0)),
            pl.BlockSpec((c_pad, 1), lambda m, k: (0, 0)),
        ],
        out_specs=pl.BlockSpec((c_pad, tile_m), lambda m, k: (0, m)),
        compiler_params=pltpu.CompilerParams(
            dimension_semantics=("parallel", "arbitrary"),
            vmem_limit_bytes=48 * 1024 * 1024,
        ),
    )(w_mat, patches, scale, shift)
    return out[:c_out, :m_dim]


def _im2col(xp, k, stride, oh, ow):
    """xp: (N, C, Hp, Wp) pre-padded input -> patches (C*k*k, N*oh*ow).

    K ordering is (c, ky, kx), matching W.reshape(c_out, c*k*k)."""
    n, c, _, _ = xp.shape
    cols = []
    for ky in range(k):
        for kx in range(k):
            cols.append(
                xp[:, :,
                   ky: ky + stride * (oh - 1) + 1: stride,
                   kx: kx + stride * (ow - 1) + 1: stride]
            )
    p = jnp.stack(cols, axis=2)        # (N, C, k*k, oh, ow)
    p = p.transpose(1, 2, 0, 3, 4)     # (C, k*k, N, oh, ow)
    return p.reshape(c * k * k, n * oh * ow)


def _fold_bn(gamma, beta, mean, var, eps):
    # Per-channel scalars folded once in f32 -> multiply-add in the kernel.
    scale = gamma / jnp.sqrt(var + eps)
    shift = beta - mean * scale
    return (scale.reshape(-1, 1).astype(jnp.float32),
            shift.reshape(-1, 1).astype(jnp.float32))


def _subpixel_upconv_weight(w_up):
    """ConvTranspose2d(k=4, s=2, p=1) weight (in, out, 4, 4) ->
    stacked sub-pixel weight (4*out, in*9) over a 3x3 window of the undilated
    input.  Phase ordering is (py, px, out_channel)."""
    inner_nc, outer_nc = w_up.shape[0], w_up.shape[1]
    # Equivalent stride-1 conv kernel: transpose channels + spatial flip.
    w_conv = jnp.transpose(w_up, (1, 0, 2, 3))[:, :, ::-1, ::-1]   # (out, in, 4, 4)
    w_comb = jnp.zeros((2, 2, outer_nc, inner_nc, 3, 3), w_up.dtype)
    for py in range(2):
        for px in range(2):
            for dy in range(3):
                ky = 2 * dy - py
                if not 0 <= ky <= 3:
                    continue
                for dx in range(3):
                    kx = 2 * dx - px
                    if not 0 <= kx <= 3:
                        continue
                    w_comb = w_comb.at[py, px, :, :, dy, dx].set(w_conv[:, :, ky, kx])
    return w_comb.reshape(4 * outer_nc, inner_nc * 9)


def unet_skip_innermost_forward(x, w_down, w_up, bn_down, bn_up, eps=1e-5):
    """x: (N, C, H, W); w_down: (inner, C, 4, 4); w_up: (inner, outer, 4, 4)
    (ConvTranspose2d layout); bn_*: (gamma, beta, running_mean, running_var)."""
    n, c_in, h, w = x.shape
    inner_nc = w_down.shape[0]
    outer_nc = w_up.shape[1]
    oh, ow = h // 2, w // 2

    # ---- down: Conv2d(k=4, s=2, p=1, bias=False) + BatchNorm + LeakyReLU(0.2)
    xp = jnp.pad(x.astype(jnp.bfloat16), ((0, 0), (0, 0), (1, 1), (1, 1)))
    p_down = _im2col(xp, 4, 2, oh, ow)                       # (c_in*16, n*oh*ow) bf16
    w_mat_d = w_down.reshape(inner_nc, c_in * 16)
    sc_d, sh_d = _fold_bn(*bn_down, eps)
    hid = _conv_bn_act_matmul(w_mat_d, p_down, sc_d, sh_d, slope=0.2)   # f32
    hid = hid.reshape(inner_nc, n, oh, ow).transpose(1, 0, 2, 3)        # (n, inner, oh, ow)

    # ---- up: ConvTranspose2d(k=4, s=2, p=1, bias=False) + BatchNorm + ReLU
    # Sub-pixel decomposition: the 4 output parity phases are 2x2-tap convs over
    # the *undilated* hidden map; they share a single 3x3 im2col (no zero MACs
    # from dilation) and are computed as one matmul with a (4*outer, inner*9)
    # stacked weight, then depth-to-space'd back to (n, outer, 2*oh, 2*ow).
    hid_p = jnp.pad(hid.astype(jnp.bfloat16), ((0, 0), (0, 0), (1, 1), (1, 1)))
    p_up = _im2col(hid_p, 3, 1, oh, ow)                      # (inner*9, n*oh*ow) bf16
    w_mat_u = _subpixel_upconv_weight(w_up)                  # (4*outer, inner*9)
    sc_u, sh_u = _fold_bn(*bn_up, eps)
    sc_u4 = jnp.tile(sc_u, (4, 1))
    sh_u4 = jnp.tile(sh_u, (4, 1))
    up = _conv_bn_act_matmul(w_mat_u, p_up, sc_u4, sh_u4, slope=0.0)    # (4*outer, n*oh*ow)

    uh, uw = 2 * oh, 2 * ow
    up = (up.reshape(2, 2, outer_nc, n, oh, ow)
            .transpose(3, 2, 4, 0, 5, 1)                     # (n, outer, oh, py, ow, px)
            .reshape(n, outer_nc, uh, uw))

    # ---- skip connection: torch.cat([x, model(x)], dim=1)
    return jnp.concatenate([x, up], axis=1)


# --------------------------- pure-JAX reference ------------------------------
def _bn_ref(y, gamma, beta, mean, var, eps):
    inv = 1.0 / jnp.sqrt(var + eps)
    return ((y - mean[None, :, None, None]) * inv[None, :, None, None]
            * gamma[None, :, None, None] + beta[None, :, None, None])


def _reference_forward(x, w_down, w_up, bn_down, bn_up, eps=1e-5):
    dn = lax.conv_general_dilated(
        x, w_down, window_strides=(2, 2), padding=((1, 1), (1, 1)),
        dimension_numbers=("NCHW", "OIHW", "NCHW"),
        precision=lax.Precision.HIGHEST)
    dn = _bn_ref(dn, *bn_down, eps)
    dn = jnp.where(dn > 0, dn, 0.2 * dn)

    w_up_conv = jnp.transpose(w_up, (1, 0, 2, 3))[:, :, ::-1, ::-1]
    up = lax.conv_general_dilated(
        dn, w_up_conv, window_strides=(1, 1), padding=((2, 2), (2, 2)),
        lhs_dilation=(2, 2),
        dimension_numbers=("NCHW", "OIHW", "NCHW"),
        precision=lax.Precision.HIGHEST)
    up = _bn_ref(up, *bn_up, eps)
    up = jnp.maximum(up, 0.0)
    return jnp.concatenate([x, up], axis=1)


if __name__ == "__main__":
    key = jax.random.PRNGKey(0)
    n, outer_nc, inner_nc, h, w = 2, 4, 8, 16, 16
    input_nc = outer_nc  # module default: input_nc=None -> outer_nc

    ks = jax.random.split(key, 11)
    x = jax.random.uniform(ks[0], (n, input_nc, h, w), dtype=jnp.float32)
    w_down = 0.1 * jax.random.normal(ks[1], (inner_nc, input_nc, 4, 4), jnp.float32)
    # ConvTranspose2d weight layout: (in_channels, out_channels, kH, kW)
    w_up = 0.1 * jax.random.normal(ks[2], (inner_nc, outer_nc, 4, 4), jnp.float32)

    bn_down = (
        jax.random.uniform(ks[3], (inner_nc,), jnp.float32, 0.5, 1.5),   # gamma
        0.1 * jax.random.normal(ks[4], (inner_nc,), jnp.float32),        # beta
        0.1 * jax.random.normal(ks[5], (inner_nc,), jnp.float32),        # running_mean
        jax.random.uniform(ks[6], (inner_nc,), jnp.float32, 0.5, 1.5),   # running_var
    )
    bn_up = (
        jax.random.uniform(ks[7], (outer_nc,), jnp.float32, 0.5, 1.5),
        0.1 * jax.random.normal(ks[8], (outer_nc,), jnp.float32),
        0.1 * jax.random.normal(ks[9], (outer_nc,), jnp.float32),
        jax.random.uniform(ks[10], (outer_nc,), jnp.float32, 0.5, 1.5),
    )

    out = unet_skip_innermost_forward(x, w_down, w_up, bn_down, bn_up)
    jax.block_until_ready(out)

    ref = _reference_forward(x, w_down, w_up, bn_down, bn_up)
    assert out.shape == (n, input_nc + outer_nc, h, w)
    assert out.dtype == jnp.float32
    max_err = float(jnp.max(jnp.abs(out - ref)))
    # Tolerance loosened vs. the pure-f32 version: operands and the hidden
    # activation are bf16 (accumulation / BN epilogue stay f32).
    assert jnp.allclose(out, ref, atol=3e-2, rtol=3e-2), max_err

    print("KERNEL_OK")
</pallas_src>

<mosaic_0001>
module attributes {stable_mosaic.version = 11 : i64} {
  func.func @_matmul_bn_act_kernel(%arg0: i32, %arg1: i32, %arg2: memref<8x64xbf16, #tpu.memory_space<vmem>>, %arg3: memref<64x128xbf16, #tpu.memory_space<vmem>>, %arg4: memref<8x1xf32, #tpu.memory_space<vmem>>, %arg5: memref<8x1xf32, #tpu.memory_space<vmem>>, %arg6: memref<8x128xf32, #tpu.memory_space<vmem>>) attributes {dimension_semantics = [#tpu.dimension_semantics<parallel>, #tpu.dimension_semantics<arbitrary>], iteration_bounds = array<i64: 1, 1>, scalar_prefetch = 0 : i64, scratch_operands = 0 : i64, tpu.core_type = #tpu.core_type<tc>, window_params = [{transform_indices = @transform_0, window_bounds = array<i64: 8, 64>}, {transform_indices = @transform_1, window_bounds = array<i64: 64, 128>}, {pipeline_mode = #tpu.pipeline_mode<synchronous>, transform_indices = @transform_2, window_bounds = array<i64: 8, 1>}, {pipeline_mode = #tpu.pipeline_mode<synchronous>, transform_indices = @transform_3, window_bounds = array<i64: 8, 1>}, {transform_indices = @transform_4, window_bounds = array<i64: 8, 128>}]} {
    %c0 = arith.constant 0 : index
    %c0_0 = arith.constant 0 : index
    %0 = vector.load %arg2[%c0, %c0_0] : memref<8x64xbf16, #tpu.memory_space<vmem>>, vector<8x64xbf16>
    %c0_1 = arith.constant 0 : index
    %c0_2 = arith.constant 0 : index
    %1 = vector.load %arg3[%c0_1, %c0_2] : memref<64x128xbf16, #tpu.memory_space<vmem>>, vector<64x128xbf16>
    %cst = arith.constant dense<0.000000e+00> : vector<8x128xf32>
    %2 = tpu.matmul %0, %1, %cst {dimension_numbers = #tpu.dot_dimension_numbers<[1], [0], [0], [1], [0, 0, 1, 1], [], []>} : vector<8x64xbf16>, vector<64x128xbf16>, vector<8x128xf32> -> vector<8x128xf32>
    %c0_i32 = arith.constant 0 : i32
    %3 = arith.cmpi eq, %arg1, %c0_i32 : i32
    %4 = arith.extui %3 : i1 to i32
    %c0_i32_3 = arith.constant 0 : i32
    %5 = arith.cmpi ne, %4, %c0_i32_3 : i32
    scf.if %5 {
      %c0_8 = arith.constant 0 : index
      %c0_9 = arith.constant 0 : index
      %12 = vector.load %arg6[%c0_8, %c0_9] : memref<8x128xf32, #tpu.memory_space<vmem>>, vector<8x128xf32>
      tpu.vector_store %arg6[%c0_8, %c0_9], %2 {strides = array<i32>} : memref<8x128xf32, #tpu.memory_space<vmem>>, vector<8x128xf32>,
    } else {
    }
    %c0_i32_4 = arith.constant 0 : i32
    %6 = arith.cmpi sgt, %arg1, %c0_i32_4 : i32
    %7 = arith.extui %6 : i1 to i32
    %c0_i32_5 = arith.constant 0 : i32
    %8 = arith.cmpi ne, %7, %c0_i32_5 : i32
    scf.if %8 {
      %c0_8 = arith.constant 0 : index
      %c0_9 = arith.constant 0 : index
      %12 = vector.load %arg6[%c0_8, %c0_9] : memref<8x128xf32, #tpu.memory_space<vmem>>, vector<8x128xf32>
      %13 = arith.addf %12, %2 : vector<8x128xf32>
      %c0_10 = arith.constant 0 : index
      %c0_11 = arith.constant 0 : index
      %14 = vector.load %arg6[%c0_10, %c0_11] : memref<8x128xf32, #tpu.memory_space<vmem>>, vector<8x128xf32>
      tpu.vector_store %arg6[%c0_10, %c0_11], %13 {strides = array<i32>} : memref<8x128xf32, #tpu.memory_space<vmem>>, vector<8x128xf32>,
    } else {
    }
    %c0_i32_6 = arith.constant 0 : i32
    %9 = arith.cmpi eq, %arg1, %c0_i32_6 : i32
    %10 = arith.extui %9 : i1 to i32
    %c0_i32_7 = arith.constant 0 : i32
    %11 = arith.cmpi ne, %10, %c0_i32_7 : i32
    scf.if %11 {
      %c0_8 = arith.constant 0 : index
      %c0_9 = arith.constant 0 : index
      %12 = vector.load %arg6[%c0_8, %c0_9] : memref<8x128xf32, #tpu.memory_space<vmem>>, vector<8x128xf32>
      %c0_10 = arith.constant 0 : index
      %c0_11 = arith.constant 0 : index
      %13 = vector.load %arg4[%c0_10, %c0_11] : memref<8x1xf32, #tpu.memory_space<vmem>>, vector<8x1xf32>
      %14 = vector.broadcast %13 : vector<8x1xf32> to vector<8x128xf32>
      %15 = arith.mulf %12, %14 : vector<8x128xf32>
      %c0_12 = arith.constant 0 : index
      %c0_13 = arith.constant 0 : index
      %16 = vector.load %arg5[%c0_12, %c0_13] : memref<8x1xf32, #tpu.memory_space<vmem>>, vector<8x1xf32>
      %17 = vector.broadcast %16 : vector<8x1xf32> to vector<8x128xf32>
      %18 = arith.addf %15, %17 : vector<8x128xf32>
      %cst_14 = arith.constant 2.000000e-01 : f32
      %19 = vector.broadcast %cst_14 : f32 to vector<8x128xf32>
      %20 = arith.mulf %19, %18 : vector<8x128xf32>
      %21 = arith.maximumf %18, %20 : vector<8x128xf32>
      %c0_15 = arith.constant 0 : index
      %c0_16 = arith.constant 0 : index
      %22 = vector.load %arg6[%c0_15, %c0_16] : memref<8x128xf32, #tpu.memory_space<vmem>>, vector<8x128xf32>
      tpu.vector_store %arg6[%c0_15, %c0_16], %21 {strides = array<i32>} : memref<8x128xf32, #tpu.memory_space<vmem>>, vector<8x128xf32>,
    } else {
    }
    return
  }
  func.func @transform_0(%arg0: i32, %arg1: i32) -> (i32, i32) {
    %c0_i32 = arith.constant 0 : i32
    %c0_i32_0 = arith.constant 0 : i32
    return %c0_i32, %arg1 : i32, i32
  }
  func.func @transform_1(%arg0: i32, %arg1: i32) -> (i32, i32) {
    %c0_i32 = arith.constant 0 : i32
    return %arg1, %arg0 : i32, i32
  }
  func.func @transform_2(%arg0: i32, %arg1: i32) -> (i32, i32) {
    %c0_i32 = arith.constant 0 : i32
    %c0_i32_0 = arith.constant 0 : i32
    %c0_i32_1 = arith.constant 0 : i32
    return %c0_i32, %c0_i32_0 : i32, i32
  }
  func.func @transform_3(%arg0: i32, %arg1: i32) -> (i32, i32) {
    %c0_i32 = arith.constant 0 : i32
    %c0_i32_0 = arith.constant 0 : i32
    %c0_i32_1 = arith.constant 0 : i32
    return %c0_i32, %c0_i32_0 : i32, i32
  }
  func.func @transform_4(%arg0: i32, %arg1: i32) -> (i32, i32) {
    %c0_i32 = arith.constant 0 : i32
    %c0_i32_0 = arith.constant 0 : i32
    return %c0_i32, %arg0 : i32, i32
  }
}

</mosaic_0001>

<llo_original>
// kernel: tpu_custom_call.1
$region0: #{tpu_custom_call.1}
  #allocation0 [shape = 'u32[]', space=smem, size = 0x4, offset = 0x4, fixed_abs, tag = 'smem constant byte address 0x4 - core index']
  #allocation1 [shape = 'u32[144,128]{1,0:T(1,128)}', space=vmem, size = 0x12000, scoped, tag = 'internal scratch']
  %s0 = inlined_call_operand.vmem [shape: bf16[8,64], index: 0, kind: input, shape index: {}]
  %s1 = inlined_call_operand.hbm [shape: bf16[64,128], index: 1, kind: input, shape index: {}]
  %s2 = inlined_call_operand.vmem [shape: f32[8,1], index: 2, kind: input, shape index: {}]
  %s3 = inlined_call_operand.vmem [shape: f32[8,1], index: 3, kind: input, shape index: {}]
  %s4 = inlined_call_operand.hbm [shape: f32[8,128], index: 4, kind: output, shape index: {}]
  %s5 = sld [smem:[#allocation0]]
  $region42: #{tpu_custom_call.1} parent=0
    _
  %s7 = ssub.s32 1, %s5
  %s8 = scalar_select 0, %s7, %s5
  $region1: #{tpu_custom_call.1} parent=0
    #allocation2 [shape = 'u8[16384]{0}', space=vmem, size = 0x4000, scoped, tag = 'input window, operand 1, single buffered']
    #allocation3 [shape = 's32[1]{0}', space=sflag, size = 0x4, scoped, tag = 'scoped memory for tpu_custom_call.1']
    #allocation4 [shape = 's32[1]{0}', space=sflag, size = 0x4, scoped, tag = 'scoped memory for tpu_custom_call.1']
    #allocation5 [shape = 'u8[4096]{0}', space=vmem, size = 0x1000, scoped, tag = 'output window, operand 0, single buffered']
    %9 = vsyncpa [#allocation3], 0
    %10 = vsyncpa [#allocation4], 0
    // Predicated region
    $region2: #{tpu_custom_call.1} parent=1 // pred_check
      _
    $region3: #{tpu_custom_call.1} parent=1 // pred_check_branch
      %12 = sbr.rel (0) target = $region5
    $region4: #{tpu_custom_call.1} parent=1 // pred_region
      _
    $region5: #{tpu_custom_call.1} parent=1 // pred_fallthru
      _
    // Predicated region
    $region6: #{tpu_custom_call.1} parent=1 // pred_check
      _
    $region7: #{tpu_custom_call.1} parent=1 // pred_check_branch
      %14 = sbr.rel (0) target = $region9
    $region8: #{tpu_custom_call.1} parent=1 // pred_region
      %s16 = ssub.s32 512, 512
      %17 = vsyncadd [#allocation3], %s16
      %s18 = sshll.u32 [#allocation2], 4
      %s19 = int_to_ptr.vmem [resolvable:$true] %s18
      %24 = dma.hbm_to_vmem [thread:$0]  %s1, 512, %s19, [#allocation3], 64, 64, 4
    $region9: #{tpu_custom_call.1} parent=1 // pred_fallthru
      _
    // Predicated region
    $region10: #{tpu_custom_call.1} parent=1 // pred_check
      _
    $region11: #{tpu_custom_call.1} parent=1 // pred_check_branch
      %26 = sbr.rel (0) target = $region13
    $region12: #{tpu_custom_call.1} parent=1 // pred_region
      _
    $region13: #{tpu_custom_call.1} parent=1 // pred_fallthru
      _
    // Predicated region
    $region14: #{tpu_custom_call.1} parent=1 // pred_check
      _
    $region15: #{tpu_custom_call.1} parent=1 // pred_check_branch
      %28 = sbr.rel (0) target = $region17
    $region16: #{tpu_custom_call.1} parent=1 // pred_region
      _
    $region17: #{tpu_custom_call.1} parent=1 // pred_fallthru
      _
    // Predicated region
    $region18: #{tpu_custom_call.1} parent=1 // pred_check
      _
    $region19: #{tpu_custom_call.1} parent=1 // pred_check_branch
      %30 = sbr.rel (0) target = $region21
    $region20: #{tpu_custom_call.1} parent=1 // pred_region
      %31 = dma.done [#allocation3], 512
    $region21: #{tpu_custom_call.1} parent=1 // pred_fallthru
      _
    %v33 = vld [vmem:[%s0] sm:$0xf]
    %v34 = vld [vmem:[#allocation2] sm:$0xf]
    %v35 = vld [vmem:[#allocation2 + $0x4] sm:$0xf]
    %v36 = vld [vmem:[#allocation2 + $0x8] sm:$0xf]
    %v37 = vld [vmem:[#allocation2 + $0xc] sm:$0xf]
    %v38 = vld [vmem:[#allocation2 + $0x10] sm:$0xf]
    %v39 = vld [vmem:[#allocation2 + $0x14] sm:$0xf]
    %v40 = vld [vmem:[#allocation2 + $0x18] sm:$0xf]
    %v41 = vld [vmem:[#allocation2 + $0x1c] sm:$0xf]
    %v50 = vunpack.c.l.b16 %v34
    %v51 = vunpack.c.l.b16 %v35
    %v52 = vunpack.c.l.b16 %v36
    %v53 = vunpack.c.l.b16 %v37
    %v54 = vunpack.c.l.b16 %v38
    %v55 = vunpack.c.l.b16 %v39
    %v56 = vunpack.c.l.b16 %v40
    %v57 = vunpack.c.l.b16 %v41
    %v58 = vpack.c.b16 %v51, %v50
    %v59 = vpack.c.b16 %v53, %v52
    %v60 = vpack.c.b16 %v55, %v54
    %v61 = vpack.c.b16 %v57, %v56
    %vm66 = vcmask 523264
    %v68 = vsel %vm66, %v33, 0
    %70 = vmatprep.subr.bf16.mxu0 0
    %71 = vmatpush1.bf16.msra.mxu0 %v58
    %72 = vmatprep.subr.bf16.mxu0 0
    %73 = vmatpush1.bf16.msra.mxu0 %v59
    %74 = vmatprep.subr.bf16.mxu0 0
    %75 = vmatpush1.bf16.msra.mxu0 %v60
    %76 = vmatprep.subr.bf16.mxu0 0
    %77 = vmatpush1.bf16.msra.mxu0 %v61
    %78 = vmatprep.subr.bf16.mxu0 0
    %79 = vmatpush1.bf16.msra.mxu0 0
    %80 = vmatprep.subr.bf16.mxu0 0
    %81 = vmatpush1.bf16.msra.mxu0 0
    %82 = vmatprep.subr.bf16.mxu0 0
    %83 = vmatpush1.bf16.msra.mxu0 0
    %84 = vmatprep.subr.bf16.mxu0 0
    %85 = vmatpush1.bf16.msra.mxu0 0
    %86 = vmatprep.subr.bf16.mxu0 0
    %87 = vmatpush1.bf16.msra.mxu0 0
    %88 = vmatprep.subr.bf16.mxu0 0
    %89 = vmatpush1.bf16.msra.mxu0 0
    %90 = vmatprep.subr.bf16.mxu0 0
    %91 = vmatpush1.bf16.msra.mxu0 0
    %92 = vmatprep.subr.bf16.mxu0 0
    %93 = vmatpush1.bf16.msra.mxu0 0
    %94 = vmatprep.subr.bf16.mxu0 0
    %95 = vmatpush1.bf16.msra.mxu0 0
    %96 = vmatprep.subr.bf16.mxu0 0
    %97 = vmatpush1.bf16.msra.mxu0 0
    %98 = vmatprep.subr.bf16.mxu0 0
    %99 = vmatpush1.bf16.msra.mxu0 0
    %100 = vmatprep.subr.bf16.mxu0 0
    %101 = vmatpush1.bf16.msra.mxu0 0
    %102 = vmatprep.mubr.bf16.mxu0 0
    %103 = vmatmul.mubr.bf16.gmra.mrb[0].mxu0 %v68
    %v104 = vpop.f32.mrb[0].mxu0
    %v105 = vadd.f32 0.0, %v104
    %v106 = vpop.f32.mrb[0].mxu0
    %v107 = vpop.f32.mrb[0].mxu0
    %v108 = vpop.f32.mrb[0].mxu0
    %109 = vdwg.mxu0
    %p110 = scmp.eq.s32.totalorder 0, 0
    // Predicated region
    $region22: #{tpu_custom_call.1} parent=1 // pred_check
      %p111 = pneg %p110
    $region23: #{tpu_custom_call.1} parent=1 // pred_check_branch
      %113 = sbr.rel (%p111) target = $region25
    $region24: #{tpu_custom_call.1} parent=1 // pred_region
      %114 = vst [vmem:[#allocation5] sm:$0xff] %v105
    $region25: #{tpu_custom_call.1} parent=1 // pred_fallthru
      _
    %p115 = scmp.gt.s32.totalorder 0, 0
    // Predicated region
    $region26: #{tpu_custom_call.1} parent=1 // pred_check
      %p116 = pneg %p115
    $region27: #{tpu_custom_call.1} parent=1 // pred_check_branch
      %118 = sbr.rel (%p116) target = $region29
    $region28: #{tpu_custom_call.1} parent=1 // pred_region
      %v119 = vld [vmem:[#allocation5] sm:$0xff]
      %v120 = vadd.f32 %v119, %v105
      %121 = vst [vmem:[#allocation5] sm:$0xff] %v120
    $region29: #{tpu_custom_call.1} parent=1 // pred_fallthru
      _
    // Predicated region
    $region30: #{tpu_custom_call.1} parent=1 // pred_check
      %p122 = pneg %p110
    $region31: #{tpu_custom_call.1} parent=1 // pred_check_branch
      %124 = sbr.rel (%p122) target = $region33
    $region32: #{tpu_custom_call.1} parent=1 // pred_region
      %v125 = vld [vmem:[#allocation5] sm:$0xff]
      %v126 = vld [vmem:[%s2] sm:$0xff]
      %128 = vset.pattern.permute.xlu0 0
      %129 = vperm.xlu0 %128, %v126
      %v130 = vpop.permute.xlu0 %129
      %v132 = vmul.f32 %v125, %v130
      %v133 = vld [vmem:[%s3] sm:$0xff]
      %135 = vset.pattern.permute.xlu0 0
      %136 = vperm.xlu0 %135, %v133
      %v137 = vpop.permute.xlu0 %136
      %v139 = vadd.f32 %v132, %v137
      %v140 = vmul.f32 %v139, 0.2
      %v141 = vmax.f32 %v139, %v140
      %142 = vst [vmem:[#allocation5] sm:$0xff] %v141
    $region33: #{tpu_custom_call.1} parent=1 // pred_fallthru
      _
    // Predicated region
    $region34: #{tpu_custom_call.1} parent=1 // pred_check
      _
    $region35: #{tpu_custom_call.1} parent=1 // pred_check_branch
      %144 = sbr.rel (0) target = $region37
    $region36: #{tpu_custom_call.1} parent=1 // pred_region
      %s146 = ssub.s32 128, 128
      %147 = vsyncadd [#allocation4], %s146
      %s149 = sshll.u32 [#allocation5], 4
      %s150 = int_to_ptr.vmem [resolvable:$true] %s149
      %152 = dma.vmem_to_hbm [thread:$0]  %s150, 128, %s4, [#allocation4]
    $region37: #{tpu_custom_call.1} parent=1 // pred_fallthru
      _
    // Predicated region
    $region38: #{tpu_custom_call.1} parent=1 // pred_check
      _
    $region39: #{tpu_custom_call.1} parent=1 // pred_check_branch
      %154 = sbr.rel (0) target = $region41
    $region40: #{tpu_custom_call.1} parent=1 // pred_region
      %155 = dma.done [#allocation4], 128
    $region41: #{tpu_custom_call.1} parent=1 // pred_fallthru
      _
    %156 = vsyncpa [#allocation3], 1
    %157 = vsyncpa [#allocation4], 1

</llo_original>
